<compile_context>
chip_gen: v6e
topology: v6e:2x2x1
jax: 0.10.0
libtpu: 0.0.40
codegen_flags: <defaults>
</compile_context>

<pallas_src>
import jax
import jax.numpy as jnp
from jax.experimental import pallas as pl
from jax.experimental.pallas import tpu as pltpu

H1, H2 = 300, 400      # logical hidden sizes (match the PyTorch module)
H1P, H2P = 384, 512    # hidden sizes padded to 128-lane multiples


def _round_up(x, m):
    return (x + m - 1) // m * m


def critic_kernel(s_ref, a_ref, w1s_ref, w1a_ref, b1_ref, w2_ref, b2_ref,
                  w3_ref, b3_ref, o_ref):
    """One batch tile of the fused Critic MLP, entirely in VMEM."""
    s = s_ref[...]                                               # [TB, S]
    a = a_ref[...]                                               # [TB, A]
    # Layer 1: concat([s,a]) @ W1  ==  s @ W1_s + a @ W1_a  (no concat needed)
    h1 = jnp.dot(s, w1s_ref[...], preferred_element_type=jnp.float32)
    h1 = h1 + jnp.dot(a, w1a_ref[...], preferred_element_type=jnp.float32)
    h1 = jnp.maximum(h1 + b1_ref[...], 0.0)                      # [TB, 384]
    # Layer 2
    h2 = jnp.dot(h1, w2_ref[...], preferred_element_type=jnp.float32)
    h2 = jnp.maximum(h2 + b2_ref[...], 0.0)                      # [TB, 512]
    # Output layer (400 -> 1): VPU multiply + lane reduce instead of an N=1
    # matmul, which would use a single MXU output lane.
    q = jnp.sum(h2 * w3_ref[...], axis=-1, keepdims=True) + b3_ref[...]
    o_ref[...] = q                                               # [TB, 1]


def critic_forward(state, action, packed_params, *, batch_tile=128):
    """Run the fused Critic MLP Pallas kernel.

    `packed_params` must come from `pack_critic_params` (split + zero-padded).
    """
    w1s, w1a, b1, w2, b2, w3, b3 = packed_params
    state = state.astype(jnp.float32)
    action = action.astype(jnp.float32)
    B, S = state.shape
    A = action.shape[1]

    # Batch tile: multiple of 8 sublanes; pad the batch so the grid is exact.
    TB = min(batch_tile, _round_up(B, 8))
    Bp = _round_up(B, TB)
    if Bp != B:
        pad = ((0, Bp - B), (0, 0))
        state = jnp.pad(state, pad)
        action = jnp.pad(action, pad)

    grid = (Bp // TB,)

    flops = 2 * Bp * ((S + A) * H1 + H1 * H2 + H2)
    bytes_accessed = 4 * (Bp * (S + A + 1)
                          + (S + A) * H1P + H1P
                          + H1P * H2P + H2P
                          + H2P + 1)

    out = pl.pallas_call(
        critic_kernel,
        out_shape=jax.ShapeDtypeStruct((Bp, 1), jnp.float32),
        grid=grid,
        in_specs=[
            pl.BlockSpec((TB, S), lambda i: (i, 0)),      # state tile
            pl.BlockSpec((TB, A), lambda i: (i, 0)),      # action tile
            pl.BlockSpec((S, H1P), lambda i: (0, 0)),     # W1_s  (resident)
            pl.BlockSpec((A, H1P), lambda i: (0, 0)),     # W1_a
            pl.BlockSpec((1, H1P), lambda i: (0, 0)),     # b1
            pl.BlockSpec((H1P, H2P), lambda i: (0, 0)),   # W2
            pl.BlockSpec((1, H2P), lambda i: (0, 0)),     # b2
            pl.BlockSpec((1, H2P), lambda i: (0, 0)),     # W3 (row form)
            pl.BlockSpec((1, 1), lambda i: (0, 0)),       # b3
        ],
        out_specs=pl.BlockSpec((TB, 1), lambda i: (i, 0)),
        compiler_params=pltpu.CompilerParams(
            dimension_semantics=("parallel",)),
        cost_estimate=pl.CostEstimate(
            flops=flops, transcendentals=0, bytes_accessed=bytes_accessed),
    )(state, action, w1s, w1a, b1, w2, b2, w3, b3)

    return out[:B]


def init_critic_params(key, state_dim, action_dim):
    """Logical (unpadded) params mirroring the PyTorch module's __init__.

    Hidden layers: PyTorch default Linear init (uniform +/- 1/sqrt(fan_in)).
    Output layer: weight ~ U(-3e-4, 3e-4), bias = 0.
    Weights stored as [in_features, out_features] (transposed vs. PyTorch).
    """
    k1, k2, k3 = jax.random.split(key, 3)
    in_dim = state_dim + action_dim

    def torch_default_linear(k, fan_in, fan_out):
        bound = 1.0 / jnp.sqrt(jnp.float32(fan_in))
        kw, kb = jax.random.split(k)
        w = jax.random.uniform(kw, (fan_in, fan_out), jnp.float32, -bound, bound)
        b = jax.random.uniform(kb, (fan_out,), jnp.float32, -bound, bound)
        return w, b

    w1, b1 = torch_default_linear(k1, in_dim, H1)
    w2, b2 = torch_default_linear(k2, H1, H2)
    w3 = jax.random.uniform(k3, (H2, 1), jnp.float32, -0.0003, 0.0003)
    b3 = jnp.zeros((1,), jnp.float32)
    return (w1, b1, w2, b2, w3, b3)


def pack_critic_params(params, state_dim):
    """Split W1 by state/action and zero-pad hidden dims 300->384, 400->512.

    Padded columns of W1/b1, padded rows/cols of W2/b2 and padded rows of W3
    are exactly zero, so the padded network computes identical outputs.
    """
    w1, b1, w2, b2, w3, b3 = params
    w1s = jnp.pad(w1[:state_dim], ((0, 0), (0, H1P - H1)))
    w1a = jnp.pad(w1[state_dim:], ((0, 0), (0, H1P - H1)))
    b1p = jnp.pad(b1, (0, H1P - H1)).reshape(1, H1P)
    w2p = jnp.pad(w2, ((0, H1P - H1), (0, H2P - H2)))
    b2p = jnp.pad(b2, (0, H2P - H2)).reshape(1, H2P)
    w3row = jnp.pad(w3[:, 0], (0, H2P - H2)).reshape(1, H2P)
    b3p = b3.reshape(1, 1)
    return (w1s, w1a, b1p, w2p, b2p, w3row, b3p)


def critic_forward_ref(state, action, params):
    """Pure-JAX reference using the logical (unpadded, concat-form) params."""
    x = jnp.concatenate([state, action], axis=1).astype(jnp.float32)
    w1, b1, w2, b2, w3, b3 = params
    h1 = jnp.maximum(x @ w1 + b1, 0.0)
    h2 = jnp.maximum(h1 @ w2 + b2, 0.0)
    return h2 @ w3 + b3


if __name__ == "__main__":
    batch, state_dim, action_dim = 8, 16, 8

    key = jax.random.PRNGKey(0)
    k_params, k_state, k_action = jax.random.split(key, 3)

    params = init_critic_params(k_params, state_dim, action_dim)
    packed = pack_critic_params(params, state_dim)

    state = jax.random.normal(k_state, (batch, state_dim), jnp.float32)
    action = jax.random.normal(k_action, (batch, action_dim), jnp.float32)

    # Small-batch (single grid step) check.
    out = jax.block_until_ready(critic_forward(state, action, packed))
    ref = critic_forward_ref(state, action, params)
    assert out.shape == (batch, 1), out.shape
    assert jnp.allclose(out, ref, atol=1e-5, rtol=1e-5), (out, ref)

    # Non-multiple batch exercising the grid + padding path (3 grid steps).
    big_b = 300
    kb_s, kb_a = jax.random.split(jax.random.PRNGKey(1))
    big_state = jax.random.normal(kb_s, (big_b, state_dim), jnp.float32)
    big_action = jax.random.normal(kb_a, (big_b, action_dim), jnp.float32)
    big_out = jax.block_until_ready(
        critic_forward(big_state, big_action, packed, batch_tile=128))
    big_ref = critic_forward_ref(big_state, big_action, params)
    assert big_out.shape == (big_b, 1), big_out.shape
    assert jnp.allclose(big_out, big_ref, atol=1e-5, rtol=1e-5)

    print("KERNEL_OK")
</pallas_src>

<mosaic_0001>
module attributes {stable_mosaic.version = 11 : i64} {
  func.func @critic_kernel(%arg0: i32, %arg1: memref<8x16xf32, #tpu.memory_space<vmem>>, %arg2: memref<8x8xf32, #tpu.memory_space<vmem>>, %arg3: memref<16x384xf32, #tpu.memory_space<vmem>>, %arg4: memref<8x384xf32, #tpu.memory_space<vmem>>, %arg5: memref<1x384xf32, #tpu.memory_space<vmem>>, %arg6: memref<384x512xf32, #tpu.memory_space<vmem>>, %arg7: memref<1x512xf32, #tpu.memory_space<vmem>>, %arg8: memref<1x512xf32, #tpu.memory_space<vmem>>, %arg9: memref<1x1xf32, #tpu.memory_space<vmem>>, %arg10: memref<8x1xf32, #tpu.memory_space<vmem>>) attributes {dimension_semantics = [#tpu.dimension_semantics<parallel>], iteration_bounds = array<i64: 1>, scalar_prefetch = 0 : i64, scratch_operands = 0 : i64, tpu.core_type = #tpu.core_type<tc>, window_params = [{transform_indices = @transform_0, window_bounds = array<i64: 8, 16>}, {transform_indices = @transform_1, window_bounds = array<i64: 8, 8>}, {pipeline_mode = #tpu.pipeline_mode<synchronous>, transform_indices = @transform_2, window_bounds = array<i64: 16, 384>}, {pipeline_mode = #tpu.pipeline_mode<synchronous>, transform_indices = @transform_3, window_bounds = array<i64: 8, 384>}, {pipeline_mode = #tpu.pipeline_mode<synchronous>, transform_indices = @transform_4, window_bounds = array<i64: 1, 384>}, {pipeline_mode = #tpu.pipeline_mode<synchronous>, transform_indices = @transform_5, window_bounds = array<i64: 384, 512>}, {pipeline_mode = #tpu.pipeline_mode<synchronous>, transform_indices = @transform_6, window_bounds = array<i64: 1, 512>}, {pipeline_mode = #tpu.pipeline_mode<synchronous>, transform_indices = @transform_7, window_bounds = array<i64: 1, 512>}, {pipeline_mode = #tpu.pipeline_mode<synchronous>, transform_indices = @transform_8, window_bounds = array<i64: 1, 1>}, {transform_indices = @transform_9, window_bounds = array<i64: 8, 1>}]} {
    %c0 = arith.constant 0 : index
    %c0_0 = arith.constant 0 : index
    %0 = vector.load %arg1[%c0, %c0_0] : memref<8x16xf32, #tpu.memory_space<vmem>>, vector<8x16xf32>
    %c0_1 = arith.constant 0 : index
    %c0_2 = arith.constant 0 : index
    %1 = vector.load %arg2[%c0_1, %c0_2] : memref<8x8xf32, #tpu.memory_space<vmem>>, vector<8x8xf32>
    %c0_3 = arith.constant 0 : index
    %c0_4 = arith.constant 0 : index
    %2 = vector.load %arg3[%c0_3, %c0_4] : memref<16x384xf32, #tpu.memory_space<vmem>>, vector<16x384xf32>
    %cst = arith.constant dense<0.000000e+00> : vector<8x384xf32>
    %3 = tpu.matmul %0, %2, %cst {dimension_numbers = #tpu.dot_dimension_numbers<[1], [0], [0], [1], [0, 0, 1, 1], [], []>} : vector<8x16xf32>, vector<16x384xf32>, vector<8x384xf32> -> vector<8x384xf32>
    %c0_5 = arith.constant 0 : index
    %c0_6 = arith.constant 0 : index
    %4 = vector.load %arg4[%c0_5, %c0_6] : memref<8x384xf32, #tpu.memory_space<vmem>>, vector<8x384xf32>
    %cst_7 = arith.constant dense<0.000000e+00> : vector<8x384xf32>
    %5 = tpu.matmul %1, %4, %cst_7 {dimension_numbers = #tpu.dot_dimension_numbers<[1], [0], [0], [1], [0, 0, 1, 1], [], []>} : vector<8x8xf32>, vector<8x384xf32>, vector<8x384xf32> -> vector<8x384xf32>
    %6 = arith.addf %3, %5 : vector<8x384xf32>
    %c0_8 = arith.constant 0 : index
    %c0_9 = arith.constant 0 : index
    %7 = vector.load %arg5[%c0_8, %c0_9] : memref<1x384xf32, #tpu.memory_space<vmem>>, vector<1x384xf32>
    %8 = vector.broadcast %7 : vector<1x384xf32> to vector<8x384xf32>
    %9 = arith.addf %6, %8 : vector<8x384xf32>
    %cst_10 = arith.constant 0.000000e+00 : f32
    %10 = vector.broadcast %cst_10 : f32 to vector<8x384xf32>
    %11 = arith.maximumf %9, %10 : vector<8x384xf32>
    %c0_11 = arith.constant 0 : index
    %c0_12 = arith.constant 0 : index
    %12 = vector.load %arg6[%c0_11, %c0_12] : memref<384x512xf32, #tpu.memory_space<vmem>>, vector<384x512xf32>
    %cst_13 = arith.constant dense<0.000000e+00> : vector<8x512xf32>
    %13 = tpu.matmul %11, %12, %cst_13 {dimension_numbers = #tpu.dot_dimension_numbers<[1], [0], [0], [1], [0, 0, 1, 1], [], []>} : vector<8x384xf32>, vector<384x512xf32>, vector<8x512xf32> -> vector<8x512xf32>
    %c0_14 = arith.constant 0 : index
    %c0_15 = arith.constant 0 : index
    %14 = vector.load %arg7[%c0_14, %c0_15] : memref<1x512xf32, #tpu.memory_space<vmem>>, vector<1x512xf32>
    %15 = vector.broadcast %14 : vector<1x512xf32> to vector<8x512xf32>
    %16 = arith.addf %13, %15 : vector<8x512xf32>
    %cst_16 = arith.constant 0.000000e+00 : f32
    %17 = vector.broadcast %cst_16 : f32 to vector<8x512xf32>
    %18 = arith.maximumf %16, %17 : vector<8x512xf32>
    %c0_17 = arith.constant 0 : index
    %c0_18 = arith.constant 0 : index
    %19 = vector.load %arg8[%c0_17, %c0_18] : memref<1x512xf32, #tpu.memory_space<vmem>>, vector<1x512xf32>
    %20 = vector.broadcast %19 : vector<1x512xf32> to vector<8x512xf32>
    %21 = arith.mulf %18, %20 : vector<8x512xf32>
    %cst_19 = arith.constant dense<0.000000e+00> : vector<8xf32>
    %22 = vector.multi_reduction <add>, %21, %cst_19 [1] : vector<8x512xf32> to vector<8xf32>
    %23 = vector.shape_cast %22 : vector<8xf32> to vector<8x1xf32>
    %c0_20 = arith.constant 0 : index
    %c0_21 = arith.constant 0 : index
    %24 = vector.load %arg9[%c0_20, %c0_21] : memref<1x1xf32, #tpu.memory_space<vmem>>, vector<1x1xf32>
    %25 = vector.broadcast %24 : vector<1x1xf32> to vector<8x1xf32>
    %26 = arith.addf %23, %25 : vector<8x1xf32>
    %c0_22 = arith.constant 0 : index
    %c0_23 = arith.constant 0 : index
    %27 = vector.load %arg10[%c0_22, %c0_23] : memref<8x1xf32, #tpu.memory_space<vmem>>, vector<8x1xf32>
    tpu.vector_store %arg10[%c0_22, %c0_23], %26 {strides = array<i32>} : memref<8x1xf32, #tpu.memory_space<vmem>>, vector<8x1xf32>,
    return
  }
  func.func @transform_0(%arg0: i32) -> (i32, i32) {
    %c0_i32 = arith.constant 0 : i32
    %c0_i32_0 = arith.constant 0 : i32
    return %arg0, %c0_i32 : i32, i32
  }
  func.func @transform_1(%arg0: i32) -> (i32, i32) {
    %c0_i32 = arith.constant 0 : i32
    %c0_i32_0 = arith.constant 0 : i32
    return %arg0, %c0_i32 : i32, i32
  }
  func.func @transform_2(%arg0: i32) -> (i32, i32) {
    %c0_i32 = arith.constant 0 : i32
    %c0_i32_0 = arith.constant 0 : i32
    %c0_i32_1 = arith.constant 0 : i32
    return %c0_i32, %c0_i32_0 : i32, i32
  }
  func.func @transform_3(%arg0: i32) -> (i32, i32) {
    %c0_i32 = arith.constant 0 : i32
    %c0_i32_0 = arith.constant 0 : i32
    %c0_i32_1 = arith.constant 0 : i32
    return %c0_i32, %c0_i32_0 : i32, i32
  }
  func.func @transform_4(%arg0: i32) -> (i32, i32) {
    %c0_i32 = arith.constant 0 : i32
    %c0_i32_0 = arith.constant 0 : i32
    %c0_i32_1 = arith.constant 0 : i32
    return %c0_i32, %c0_i32_0 : i32, i32
  }
  func.func @transform_5(%arg0: i32) -> (i32, i32) {
    %c0_i32 = arith.constant 0 : i32
    %c0_i32_0 = arith.constant 0 : i32
    %c0_i32_1 = arith.constant 0 : i32
    return %c0_i32, %c0_i32_0 : i32, i32
  }
  func.func @transform_6(%arg0: i32) -> (i32, i32) {
    %c0_i32 = arith.constant 0 : i32
    %c0_i32_0 = arith.constant 0 : i32
    %c0_i32_1 = arith.constant 0 : i32
    return %c0_i32, %c0_i32_0 : i32, i32
  }
  func.func @transform_7(%arg0: i32) -> (i32, i32) {
    %c0_i32 = arith.constant 0 : i32
    %c0_i32_0 = arith.constant 0 : i32
    %c0_i32_1 = arith.constant 0 : i32
    return %c0_i32, %c0_i32_0 : i32, i32
  }
  func.func @transform_8(%arg0: i32) -> (i32, i32) {
    %c0_i32 = arith.constant 0 : i32
    %c0_i32_0 = arith.constant 0 : i32
    %c0_i32_1 = arith.constant 0 : i32
    return %c0_i32, %c0_i32_0 : i32, i32
  }
  func.func @transform_9(%arg0: i32) -> (i32, i32) {
    %c0_i32 = arith.constant 0 : i32
    %c0_i32_0 = arith.constant 0 : i32
    return %arg0, %c0_i32 : i32, i32
  }
}

</mosaic_0001>

<llo_original>
// kernel: tpu_custom_call.1
$region0: #{tpu_custom_call.1}
  #allocation0 [shape = 'u32[]', space=smem, size = 0x4, offset = 0x4, fixed_abs, tag = 'smem constant byte address 0x4 - core index']
  #allocation1 [shape = 'u32[144,128]{1,0:T(1,128)}', space=vmem, size = 0x12000, scoped, tag = 'internal scratch']
  #allocation2 [shape = 'f32[1,1]{1,0:T(1,128)S(1)}', space=vmem, size = 0x200, scoped, tag = 'scoped memory for tpu_custom_call.1']
  %s0 = inlined_call_operand.hbm [shape: f32[8,16], index: 0, kind: input, shape index: {}]
  %s1 = inlined_call_operand.hbm [shape: f32[8,8], index: 1, kind: input, shape index: {}]
  %s2 = inlined_call_operand.hbm [shape: f32[16,384], index: 2, kind: input, shape index: {}]
  %s3 = inlined_call_operand.hbm [shape: f32[8,384], index: 3, kind: input, shape index: {}]
  %s4 = inlined_call_operand.hbm [shape: f32[1,384], index: 4, kind: input, shape index: {}]
  %s5 = inlined_call_operand.hbm [shape: f32[384,512], index: 5, kind: input, shape index: {}]
  %s6 = inlined_call_operand.vmem [shape: f32[1,512], index: 6, kind: input, shape index: {}]
  %s7 = inlined_call_operand.vmem [shape: f32[1,512], index: 7, kind: input, shape index: {}]
  %s8 = inlined_call_operand.<no memory space> [shape: f32[1,1], index: 8, kind: input, shape index: {}]
  %s9 = inlined_call_operand.vmem [shape: f32[8,1], index: 9, kind: output, shape index: {}]
  %s10 = sld [smem:[#allocation0]]
  $region70: #{tpu_custom_call.1} parent=0
    _
  %s12 = ssub.s32 1, %s10
  %s13 = scalar_select 0, %s12, %s10
  %v14 = vstv %s8
  %15 = vst [vmem:[#allocation2] sm:$0x1] %v14
  $region1: #{tpu_custom_call.1} parent=0
    #allocation3 [shape = 'u8[4096]{0}', space=vmem, size = 0x1000, scoped, tag = 'input window, operand 0, single buffered']
    #allocation4 [shape = 's32[1]{0}', space=sflag, size = 0x4, scoped, tag = 'scoped memory for tpu_custom_call.1']
    #allocation5 [shape = 'u8[4096]{0}', space=vmem, size = 0x1000, scoped, tag = 'input window, operand 1, single buffered']
    #allocation6 [shape = 's32[1]{0}', space=sflag, size = 0x4, scoped, tag = 'scoped memory for tpu_custom_call.1']
    #allocation7 [shape = 'u8[24576]{0}', space=vmem, size = 0x6000, scoped, tag = 'input window, operand 2, single buffered']
    #allocation8 [shape = 'u8[12288]{0}', space=vmem, size = 0x3000, scoped, tag = 'input window, operand 3, single buffered']
    #allocation9 [shape = 's32[1]{0}', space=sflag, size = 0x4, scoped, tag = 'scoped memory for tpu_custom_call.1']
    #allocation10 [shape = 'u8[1536]{0}', space=vmem, size = 0x800, scoped, tag = 'input window, operand 4, single buffered']
    #allocation11 [shape = 'u8[786432]{0}', space=vmem, size = 0xc0000, scoped, tag = 'input window, operand 5, single buffered']
    #allocation12 [shape = 's32[1]{0}', space=sflag, size = 0x4, scoped, tag = 'scoped memory for tpu_custom_call.1']
    %16 = vsyncpa [#allocation4], 0
    %17 = vsyncpa [#allocation6], 0
    %18 = vsyncpa [#allocation9], 0
    %19 = vsyncpa [#allocation12], 0
    // Predicated region
    $region2: #{tpu_custom_call.1} parent=1 // pred_check
      _
    $region3: #{tpu_custom_call.1} parent=1 // pred_check_branch
      %21 = sbr.rel (0) target = $region5
    $region4: #{tpu_custom_call.1} parent=1 // pred_region
      %s23 = ssub.s32 128, 128
      %24 = vsyncadd [#allocation4], %s23
      %s26 = sshll.u32 [#allocation3], 4
      %s27 = int_to_ptr.vmem [resolvable:$true] %s26
      %29 = dma.hbm_to_vmem [thread:$0]  %s0, 128, %s27, [#allocation4]
    $region5: #{tpu_custom_call.1} parent=1 // pred_fallthru
      _
    // Predicated region
    $region6: #{tpu_custom_call.1} parent=1 // pred_check
      _
    $region7: #{tpu_custom_call.1} parent=1 // pred_check_branch
      %31 = sbr.rel (0) target = $region9
    $region8: #{tpu_custom_call.1} parent=1 // pred_region
      %s33 = ssub.s32 128, 128
      %34 = vsyncadd [#allocation6], %s33
      %s36 = sshll.u32 [#allocation5], 4
      %s37 = int_to_ptr.vmem [resolvable:$true] %s36
      %39 = dma.hbm_to_vmem [thread:$0]  %s1, 128, %s37, [#allocation6]
    $region9: #{tpu_custom_call.1} parent=1 // pred_fallthru
      _
    // Predicated region
    $region10: #{tpu_custom_call.1} parent=1 // pred_check
      _
    $region11: #{tpu_custom_call.1} parent=1 // pred_check_branch
      %41 = sbr.rel (0) target = $region13
    $region12: #{tpu_custom_call.1} parent=1 // pred_region
      %s43 = ssub.s32 768, 768
      %44 = vsyncadd [#allocation6], %s43
      %s45 = sshll.u32 [#allocation7], 4
      %s46 = int_to_ptr.vmem [resolvable:$true] %s45
      %51 = dma.hbm_to_vmem [thread:$0]  %s2, 768, %s46, [#allocation6], 384, 384, 24
    $region13: #{tpu_custom_call.1} parent=1 // pred_fallthru
      _
    // Predicated region
    $region14: #{tpu_custom_call.1} parent=1 // pred_check
      _
    $region15: #{tpu_custom_call.1} parent=1 // pred_check_branch
      %53 = sbr.rel (0) target = $region17
    $region16: #{tpu_custom_call.1} parent=1 // pred_region
      %s55 = ssub.s32 384, 384
      %56 = vsyncadd [#allocation9], %s55
      %s58 = sshll.u32 [#allocation8], 4
      %s59 = int_to_ptr.vmem [resolvable:$true] %s58
      %61 = dma.hbm_to_vmem [thread:$0]  %s3, 384, %s59, [#allocation9]
    $region17: #{tpu_custom_call.1} parent=1 // pred_fallthru
      _
    // Predicated region
    $region18: #{tpu_custom_call.1} parent=1 // pred_check
      _
    $region19: #{tpu_custom_call.1} parent=1 // pred_check_branch
      %63 = sbr.rel (0) target = $region21
    $region20: #{tpu_custom_call.1} parent=1 // pred_region
      %s65 = ssub.s32 48, 48
      %66 = vsyncadd [#allocation9], %s65
      %s68 = sshll.u32 [#allocation10], 4
      %s69 = int_to_ptr.vmem [resolvable:$true] %s68
      %71 = dma.hbm_to_vmem [thread:$0]  %s4, 48, %s69, [#allocation9]
    $region21: #{tpu_custom_call.1} parent=1 // pred_fallthru
      _
    // Predicated region
    $region22: #{tpu_custom_call.1} parent=1 // pred_check
      _
    $region23: #{tpu_custom_call.1} parent=1 // pred_check_branch
      %73 = sbr.rel (0) target = $region25
    $region24: #{tpu_custom_call.1} parent=1 // pred_region
      %s75 = ssub.s32 24576, 24576
      %76 = vsyncadd [#allocation12], %s75
      %s77 = sshll.u32 [#allocation11], 4
      %s78 = int_to_ptr.vmem [resolvable:$true] %s77
      %83 = dma.hbm_to_vmem [thread:$0]  %s5, 24576, %s78, [#allocation12], 512, 512, 32
    $region25: #{tpu_custom_call.1} parent=1 // pred_fallthru
      _
    // Predicated region
    $region26: #{tpu_custom_call.1} parent=1 // pred_check
      _
    $region27: #{tpu_custom_call.1} parent=1 // pred_check_branch
      %85 = sbr.rel (0) target = $region29
    $region28: #{tpu_custom_call.1} parent=1 // pred_region
      _
    $region29: #{tpu_custom_call.1} parent=1 // pred_fallthru
      _
    // Predicated region
    $region30: #{tpu_custom_call.1} parent=1 // pred_check
      _
    $region31: #{tpu_custom_call.1} parent=1 // pred_check_branch
      %87 = sbr.rel (0) target = $region33
    $region32: #{tpu_custom_call.1} parent=1 // pred_region
      _
    $region33: #{tpu_custom_call.1} parent=1 // pred_fallthru
      _
    // Predicated region
    $region34: #{tpu_custom_call.1} parent=1 // pred_check
      _
    $region35: #{tpu_custom_call.1} parent=1 // pred_check_branch
      %89 = sbr.rel (0) target = $region37
    $region36: #{tpu_custom_call.1} parent=1 // pred_region
      _
    $region37: #{tpu_custom_call.1} parent=1 // pred_fallthru
      _
    // Predicated region
    $region38: #{tpu_custom_call.1} parent=1 // pred_check
      _
    $region39: #{tpu_custom_call.1} parent=1 // pred_check_branch
      %91 = sbr.rel (0) target = $region41
    $region40: #{tpu_custom_call.1} parent=1 // pred_region
      %92 = dma.done [#allocation4], 128
    $region41: #{tpu_custom_call.1} parent=1 // pred_fallthru
      _
    // Predicated region
    $region42: #{tpu_custom_call.1} parent=1 // pred_check
      _
    $region43: #{tpu_custom_call.1} parent=1 // pred_check_branch
      %94 = sbr.rel (0) target = $region45
    $region44: #{tpu_custom_call.1} parent=1 // pred_region
      %95 = dma.done [#allocation6], 128
    $region45: #{tpu_custom_call.1} parent=1 // pred_fallthru
      _
    // Predicated region
    $region46: #{tpu_custom_call.1} parent=1 // pred_check
      _
    $region47: #{tpu_custom_call.1} parent=1 // pred_check_branch
      %97 = sbr.rel (0) target = $region49
    $region48: #{tpu_custom_call.1} parent=1 // pred_region
      %98 = dma.done [#allocation6], 768
    $region49: #{tpu_custom_call.1} parent=1 // pred_fallthru
      _
    // Predicated region
    $region50: #{tpu_custom_call.1} parent=1 // pred_check
      _
    $region51: #{tpu_custom_call.1} parent=1 // pred_check_branch
      %100 = sbr.rel (0) target = $region53
    $region52: #{tpu_custom_call.1} parent=1 // pred_region
      %101 = dma.done [#allocation9], 384
    $region53: #{tpu_custom_call.1} parent=1 // pred_fallthru
      _
    // Predicated region
    $region54: #{tpu_custom_call.1} parent=1 // pred_check
      _
    $region55: #{tpu_custom_call.1} parent=1 // pred_check_branch
      %103 = sbr.rel (0) target = $region57
    $region56: #{tpu_custom_call.1} parent=1 // pred_region
      %104 = dma.done [#allocation9], 48
    $region57: #{tpu_custom_call.1} parent=1 // pred_fallthru
      _
    // Predicated region
    $region58: #{tpu_custom_call.1} parent=1 // pred_check
      _
    $region59: #{tpu_custom_call.1} parent=1 // pred_check_branch
      %106 = sbr.rel (0) target = $region61
    $region60: #{tpu_custom_call.1} parent=1 // pred_region
      %107 = dma.done [#allocation12], 24576
    $region61: #{tpu_custom_call.1} parent=1 // pred_fallthru
      _
    %v108 = vld [vmem:[#allocation3] sm:$0xff]
    %v109 = vld [vmem:[#allocation5] sm:$0xff]
    %v110 = vld [vmem:[#allocation7] sm:$0xff]
    %v111 = vld [vmem:[#allocation7 + $0x8] sm:$0xff]
    %v112 = vld [vmem:[#allocation7 + $0x10] sm:$0xff]
    %v113 = vld [vmem:[#allocation7 + $0x18] sm:$0xff]
    %v114 = vld [vmem:[#allocation7 + $0x20] sm:$0xff]
    %v115 = vld [vmem:[#allocation7 + $0x28] sm:$0xff]
    %v116 = vld [vmem:[#allocation8] sm:$0xff]
    %v117 = vld [vmem:[#allocation8 + $0x8] sm:$0xff]
    %v118 = vld [vmem:[#allocation8 + $0x10] sm:$0xff]
    %vm119 = vcmask 64512
    %v121 = vsel %vm119, %v109, 0
    %123 = vmatprep.subr.mxu0 0.0
    %124 = vmatpush1.msra.mxu0 0.0
    %125 = vmatprep.subr.mxu0 0.0
    %126 = vmatpush1.msra.mxu0 0.0
    %127 = vmatprep.subr.mxu0 0.0
    %128 = vmatpush1.msra.mxu0 0.0
    %129 = vmatprep.subr.mxu0 0.0
    %130 = vmatpush1.msra.mxu0 0.0
    %131 = vmatprep.subr.mxu0 0.0
    %132 = vmatpush1.msra.mxu0 0.0
    %133 = vmatprep.subr.mxu0 0.0
    %134 = vmatpush1.msra.mxu0 0.0
    %135 = vmatprep.subr.mxu0 0.0
    %136 = vmatpush1.msra.mxu0 0.0
    %137 = vmatprep.subr.mxu0 0.0
    %138 = vmatpush1.msra.mxu0 0.0
    %139 = vmatprep.subr.mxu0 0.0
    %140 = vmatpush1.msra.mxu0 0.0
    %141 = vmatprep.subr.mxu0 0.0
    %142 = vmatpush1.msra.mxu0 0.0
    %143 = vmatprep.subr.mxu0 0.0
    %144 = vmatpush1.msra.mxu0 0.0
    %145 = vmatprep.subr.mxu0 0.0
    %146 = vmatpush1.msra.mxu0 0.0
    %147 = vmatprep.subr.mxu0 0.0
    %148 = vmatpush1.msra.mxu0 0.0
    %149 = vmatprep.subr.mxu0 0.0
    %150 = vmatpush1.msra.mxu0 0.0
    %151 = vmatprep.subr.mxu0 0.0
    %152 = vmatpush1.msra.mxu0 0.0
    %153 = vmatprep.subr.mxu0 %v117
    %154 = vmatpush1.msra.mxu0 %v116
    %155 = vmatprep.subr.mxu0 0.0
    %156 = vmatpush2.msra.mxu0 0.0
    %157 = vmatprep.subr.mxu0 0.0
    %158 = vmatpush2.msra.mxu0 0.0
    %159 = vmatprep.subr.mxu0 0.0
    %160 = vmatpush2.msra.mxu0 0.0
    %161 = vmatprep.subr.mxu0 0.0
    %162 = vmatpush2.msra.mxu0 0.0
    %163 = vmatprep.subr.mxu0 0.0
    %164 = vmatpush2.msra.mxu0 0.0
    %165 = vmatprep.subr.mxu0 0.0
    %166 = vmatpush2.msra.mxu0 0.0
    %167 = vmatprep.subr.mxu0 0.0
    %168 = vmatpush2.msra.mxu0 0.0
    %169 = vmatprep.subr.mxu0 0.0
    %170 = vmatpush2.msra.mxu0 0.0
    %171 = vmatprep.subr.mxu0 0.0
    %172 = vmatpush2.msra.mxu0 0.0
    %173 = vmatprep.subr.mxu0 0.0
    %174 = vmatpush2.msra.mxu0 0.0
    %175 = vmatprep.subr.mxu0 0.0
    %176 = vmatpush2.msra.mxu0 0.0
    %177 = vmatprep.subr.mxu0 0.0
    %178 = vmatpush2.msra.mxu0 0.0
    %179 = vmatprep.subr.mxu0 0.0
    %180 = vmatpush2.msra.mxu0 0.0
    %181 = vmatprep.subr.mxu0 0.0
    %182 = vmatpush2.msra.mxu0 0.0
    %183 = vmatprep.subr.mxu0 0.0
    %184 = vmatpush2.msra.mxu0 0.0
    %185 = vmatprep.subr.mxu0 0.0
    %186 = vmatpush2.msra.mxu0 0.0
    %187 = vmatprep.mubr.f32.mxu0 0.0
    %188 = vmatmul.mubr.f32.gmra.mxu0 %v121
    %v189 = vpop.f32.mrf.mxu0
    %v190 = vadd.f32 0.0, %v189
    %v191 = vpop.f32.mrf.mxu0
    %v192 = vadd.f32 0.0, %v191
    %193 = vdwg.mxu0
    %194 = vmatprep.subr.mxu0 0.0
    %195 = vmatpush1.msra.mxu0 0.0
    %196 = vmatprep.subr.mxu0 0.0
    %197 = vmatpush1.msra.mxu0 0.0
    %198 = vmatprep.subr.mxu0 0.0
    %199 = vmatpush1.msra.mxu0 0.0
    %200 = vmatprep.subr.mxu0 0.0
    %201 = vmatpush1.msra.mxu0 0.0
    %202 = vmatprep.subr.mxu0 0.0
    %203 = vmatpush1.msra.mxu0 0.0
    %204 = vmatprep.subr.mxu0 0.0
    %205 = vmatpush1.msra.mxu0 0.0
    %206 = vmatprep.subr.mxu0 0.0
    %207 = vmatpush1.msra.mxu0 0.0
    %208 = vmatprep.subr.mxu0 0.0
    %209 = vmatpush1.msra.mxu0 0.0
    %210 = vmatprep.subr.mxu0 0.0
    %211 = vmatpush1.msra.mxu0 0.0
    %212 = vmatprep.subr.mxu0 0.0
    %213 = vmatpush1.msra.mxu0 0.0
    %214 = vmatprep.subr.mxu0 0.0
    %215 = vmatpush1.msra.mxu0 0.0
    %216 = vmatprep.subr.mxu0 0.0
    %217 = vmatpush1.msra.mxu0 0.0
    %218 = vmatprep.subr.mxu0 0.0
    %219 = vmatpush1.msra.mxu0 0.0
    %220 = vmatprep.subr.mxu0 0.0
    %221 = vmatpush1.msra.mxu0 0.0
    %222 = vmatprep.subr.mxu0 0.0
    %223 = vmatpush1.msra.mxu0 0.0
    %224 = vmatprep.subr.mxu0 0.0
    %225 = vmatpush1.msra.mxu0 %v118
    %226 = vmatprep.subr.mxu0 0.0
    %227 = vmatpush2.msra.mxu0 0.0
    %228 = vmatprep.subr.mxu0 0.0
    %229 = vmatpush2.msra.mxu0 0.0
    %230 = vmatprep.subr.mxu0 0.0
    %231 = vmatpush2.msra.mxu0 0.0
    %232 = vmatprep.subr.mxu0 0.0
    %233 = vmatpush2.msra.mxu0 0.0
    %234 = vmatprep.subr.mxu0 0.0
    %235 = vmatpush2.msra.mxu0 0.0
    %236 = vmatprep.subr.mxu0 0.0
    %237 = vmatpush2.msra.mxu0 0.0
    %238 = vmatprep.subr.mxu0 0.0
    %239 = vmatpush2.msra.mxu0 0.0
    %240 = vmatprep.subr.mxu0 0.0
    %241 = vmatpush2.msra.mxu0 0.0
    %242 = vmatprep.subr.mxu0 0.0
    %243 = vmatpush2.msra.mxu0 0.0
    %244 = vmatprep.subr.mxu0 0.0
    %245 = vmatpush2.msra.mxu0 0.0
    %246 = vmatprep.subr.mxu0 0.0
    %247 = vmatpush2.msra.mxu0 0.0
    %248 = vmatprep.subr.mxu0 0.0
    %249 = vmatpush2.msra.mxu0 0.0
    %250 = vmatprep.subr.mxu0 0.0
    %251 = vmatpush2.msra.mxu0 0.0
    %252 = vmatprep.subr.mxu0 0.0
    %253 = vmatpush2.msra.mxu0 0.0
    %254 = vmatprep.subr.mxu0 0.0
    %255 = vmatpush2.msra.mxu0 0.0
    %256 = vmatprep.subr.mxu0 0.0
    %257 = vmatpush2.msra.mxu0 0.0
    %258 = vmatprep.mubr.f32.mxu0 0.0
    %259 = vmatmul.mubr.f32.gmra.mxu0 %v121
    %v260 = vpop.f32.mrf.mxu0
    %v261 = vadd.f32 0.0, %v260
    %v262 = vpop.f32.mrf.mxu0
    %263 = vdwg.mxu0
    %vm264 = vcmask 130048
    %v266 = vsel %vm264, %v108, 0
    %268 = vmatprep.subr.mxu0 0.0
    %269 = vmatpush1.msra.mxu0 0.0
    %270 = vmatprep.subr.mxu0 0.0
    %271 = vmatpush1.msra.mxu0 0.0
    %272 = vmatprep.subr.mxu0 0.0
    %273 = vmatpush1.msra.mxu0 0.0
    %274 = vmatprep.subr.mxu0 0.0
    %275 = vmatpush1.msra.mxu0 0.0
    %276 = vmatprep.subr.mxu0 0.0
    %277 = vmatpush1.msra.mxu0 0.0
    %278 = vmatprep.subr.mxu0 0.0
    %279 = vmatpush1.msra.mxu0 0.0
    %280 = vmatprep.subr.mxu0 0.0
    %281 = vmatpush1.msra.mxu0 0.0
    %282 = vmatprep.subr.mxu0 0.0
    %283 = vmatpush1.msra.mxu0 0.0
    %284 = vmatprep.subr.mxu0 0.0
    %285 = vmatpush1.msra.mxu0 0.0
    %286 = vmatprep.subr.mxu0 0.0
    %287 = vmatpush1.msra.mxu0 0.0
    %288 = vmatprep.subr.mxu0 0.0
    %289 = vmatpush1.msra.mxu0 0.0
    %290 = vmatprep.subr.mxu0 0.0
    %291 = vmatpush1.msra.mxu0 0.0
    %292 = vmatprep.subr.mxu0 0.0
    %293 = vmatpush1.msra.mxu0 0.0
    %294 = vmatprep.subr.mxu0 0.0
    %295 = vmatpush1.msra.mxu0 0.0
    %296 = vmatprep.subr.mxu0 %v114
    %297 = vmatpush1.msra.mxu0 %v113
    %298 = vmatprep.subr.mxu0 %v111
    %299 = vmatpush1.msra.mxu0 %v110
    %300 = vmatprep.subr.mxu0 0.0
    %301 = vmatpush2.msra.mxu0 0.0
    %302 = vmatprep.subr.mxu0 0.0
    %303 = vmatpush2.msra.mxu0 0.0
    %304 = vmatprep.subr.mxu0 0.0
    %305 = vmatpush2.msra.mxu0 0.0
    %306 = vmatprep.subr.mxu0 0.0
    %307 = vmatpush2.msra.mxu0 0.0
    %308 = vmatprep.subr.mxu0 0.0
    %309 = vmatpush2.msra.mxu0 0.0
    %310 = vmatprep.subr.mxu0 0.0
    %311 = vmatpush2.msra.mxu0 0.0
    %312 = vmatprep.subr.mxu0 0.0
    %313 = vmatpush2.msra.mxu0 0.0
    %314 = vmatprep.subr.mxu0 0.0
    %315 = vmatpush2.msra.mxu0 0.0
    %316 = vmatprep.subr.mxu0 0.0
    %317 = vmatpush2.msra.mxu0 0.0
    %318 = vmatprep.subr.mxu0 0.0
    %319 = vmatpush2.msra.mxu0 0.0
    %320 = vmatprep.subr.mxu0 0.0
    %321 = vmatpush2.msra.mxu0 0.0
    %322 = vmatprep.subr.mxu0 0.0
    %323 = vmatpush2.msra.mxu0 0.0
    %324 = vmatprep.subr.mxu0 0.0
    %325 = vmatpush2.msra.mxu0 0.0
    %326 = vmatprep.subr.mxu0 0.0
    %327 = vmatpush2.msra.mxu0 0.0
    %328 = vmatprep.subr.mxu0 0.0
    %329 = vmatpush2.msra.mxu0 0.0
    %330 = vmatprep.subr.mxu0 0.0
    %331 = vmatpush2.msra.mxu0 0.0
    %332 = vmatprep.mubr.f32.mxu0 0.0
    %333 = vmatmul.mubr.f32.gmra.mxu0 %v266
    %v334 = vpop.f32.mrf.mxu0
    %v335 = vadd.f32 %v190, %v334
    %v336 = vpop.f32.mrf.mxu0
    %v337 = vadd.f32 %v192, %v336
    %338 = vdwg.mxu0
    %339 = vmatprep.subr.mxu0 0.0
    %340 = vmatpush1.msra.mxu0 0.0
    %341 = vmatprep.subr.mxu0 0.0
    %342 = vmatpush1.msra.mxu0 0.0
    %343 = vmatprep.subr.mxu0 0.0
    %344 = vmatpush1.msra.mxu0 0.0
    %345 = vmatprep.subr.mxu0 0.0
    %346 = vmatpush1.msra.mxu0 0.0
    %347 = vmatprep.subr.mxu0 0.0
    %348 = vmatpush1.msra.mxu0 0.0
    %349 = vmatprep.subr.mxu0 0.0
    %350 = vmatpush1.msra.mxu0 0.0
    %351 = vmatprep.subr.mxu0 0.0
    %352 = vmatpush1.msra.mxu0 0.0
    %353 = vmatprep.subr.mxu0 0.0
    %354 = vmatpush1.msra.mxu0 0.0
    %355 = vmatprep.subr.mxu0 0.0
    %356 = vmatpush1.msra.mxu0 0.0
    %357 = vmatprep.subr.mxu0 0.0
    %358 = vmatpush1.msra.mxu0 0.0
    %359 = vmatprep.subr.mxu0 0.0
    %360 = vmatpush1.msra.mxu0 0.0
    %361 = vmatprep.subr.mxu0 0.0
    %362 = vmatpush1.msra.mxu0 0.0
    %363 = vmatprep.subr.mxu0 0.0
    %364 = vmatpush1.msra.mxu0 0.0
    %365 = vmatprep.subr.mxu0 0.0
    %366 = vmatpush1.msra.mxu0 0.0
    %367 = vmatprep.subr.mxu0 0.0
    %368 = vmatpush1.msra.mxu0 %v115
    %369 = vmatprep.subr.mxu0 0.0
    %370 = vmatpush1.msra.mxu0 %v112
    %371 = vmatprep.subr.mxu0 0.0
    %372 = vmatpush2.msra.mxu0 0.0
    %373 = vmatprep.subr.mxu0 0.0
    %374 = vmatpush2.msra.mxu0 0.0
    %375 = vmatprep.subr.mxu0 0.0
    %376 = vmatpush2.msra.mxu0 0.0
    %377 = vmatprep.subr.mxu0 0.0
    %378 = vmatpush2.msra.mxu0 0.0
    %379 = vmatprep.subr.mxu0 0.0
    %380 = vmatpush2.msra.mxu0 0.0
    %381 = vmatprep.subr.mxu0 0.0
    %382 = vmatpush2.msra.mxu0 0.0
    %383 = vmatprep.subr.mxu0 0.0
    %384 = vmatpush2.msra.mxu0 0.0
    %385 = vmatprep.subr.mxu0 0.0
    %386 = vmatpush2.msra.mxu0 0.0
    %387 = vmatprep.subr.mxu0 0.0
    %388 = vmatpush2.msra.mxu0 0.0
    %389 = vmatprep.subr.mxu0 0.0
    %390 = vmatpush2.msra.mxu0 0.0
    %391 = vmatprep.subr.mxu0 0.0
    %392 = vmatpush2.msra.mxu0 0.0
    %393 = vmatprep.subr.mxu0 0.0
    %394 = vmatpush2.msra.mxu0 0.0
    %395 = vmatprep.subr.mxu0 0.0
    %396 = vmatpush2.msra.mxu0 0.0
    %397 = vmatprep.subr.mxu0 0.0
    %398 = vmatpush2.msra.mxu0 0.0
    %399 = vmatprep.subr.mxu0 0.0
    %400 = vmatpush2.msra.mxu0 0.0
    %401 = vmatprep.subr.mxu0 0.0
    %402 = vmatpush2.msra.mxu0 0.0
    %403 = vmatprep.mubr.f32.mxu0 0.0
    %404 = vmatmul.mubr.f32.gmra.mxu0 %v266
    %v405 = vpop.f32.mrf.mxu0
    %v406 = vadd.f32 %v261, %v405
    %v407 = vpop.f32.mrf.mxu0
    %408 = vdwg.mxu0
    %v409 = vld [vmem:[#allocation10] sm:$0x7]
    %v411 = vlaneseq
    %v412 = vshrl.u32 %v411, 7
    %v413 = vsub.s32 0, %v412
    %v414 = vrot.slane %v409, %v413
    %v415 = vlaneseq
    %v416 = vshrl.u32 %v415, 7
    %v417 = vsub.s32 1, %v416
    %v418 = vrot.slane %v409, %v417
    %v419 = vlaneseq
    %v420 = vshrl.u32 %v419, 7
    %v421 = vsub.s32 2, %v420
    %v422 = vrot.slane %v409, %v421
    %v426 = vadd.f32 %v335, %v414
    %v427 = vadd.f32 %v337, %v418
    %v428 = vadd.f32 %v406, %v422
    %v429 = vmax.f32 %v426, 0.0
    %v430 = vmax.f32 %v427, 0.0
    %v431 = vmax.f32 %v428, 0.0
    %v432 = vld [vmem:[#allocation11] sm:$0xff]
    %v433 = vld [vmem:[#allocation11 + $0x8] sm:$0xff]
    %v434 = vld [vmem:[#allocation11 + $0x10] sm:$0xff]
    %v435 = vld [vmem:[#allocation11 + $0x18] sm:$0xff]
    %v436 = vld [vmem:[#allocation11 + $0x20] sm:$0xff]
    %v437 = vld [vmem:[#allocation11 + $0x28] sm:$0xff]
    %v438 = vld [vmem:[#allocation11 + $0x30] sm:$0xff]
    %v439 = vld [vmem:[#allocation11 + $0x38] sm:$0xff]
    %v440 = vld [vmem:[#allocation11 + $0x40] sm:$0xff]
    %v441 = vld [vmem:[#allocation11 + $0x48] sm:$0xff]
    %v442 = vld [vmem:[#allocation11 + $0x50] sm:$0xff]
    %v443 = vld [vmem:[#allocation11 + $0x58] sm:$0xff]
    %v444 = vld [vmem:[#allocation11 + $0x60] sm:$0xff]
    %v445 = vld [vmem:[#allocation11 + $0x68] sm:$0xff]
    %v446 = vld [vmem:[#allocation11 + $0x70] sm:$0xff]
    %v447 = vld [vmem:[#allocation11 + $0x78] sm:$0xff]
    %v448 = vld [vmem:[#allocation11 + $0x80] sm:$0xff]
    %v449 = vld [vmem:[#allocation11 + $0x88] sm:$0xff]
    %v450 = vld [vmem:[#allocation11 + $0x90] sm:$0xff]
    %v451 = vld [vmem:[#allocation11 + $0x98] sm:$0xff]
    %v452 = vld [vmem:[#allocation11 + $0xa0] sm:$0xff]
    %v453 = vld [vmem:[#allocation11 + $0xa8] sm:$0xff]
    %v454 = vld [vmem:[#allocation11 + $0xb0] sm:$0xff]
    %v455 = vld [vmem:[#allocation11 + $0xb8] sm:$0xff]
    %v456 = vld [vmem:[#allocation11 + $0xc0] sm:$0xff]
    %v457 = vld [vmem:[#allocation11 + $0xc8] sm:$0xff]
    %v458 = vld [vmem:[#allocation11 + $0xd0] sm:$0xff]
    %v459 = vld [vmem:[#allocation11 + $0xd8] sm:$0xff]
    %v460 = vld [vmem:[#allocation11 + $0xe0] sm:$0xff]
    %v461 = vld [vmem:[#allocation11 + $0xe8] sm:$0xff]
    %v462 = vld [vmem:[#allocation11 + $0xf0] sm:$0xff]
    %v463 = vld [vmem:[#allocation11 + $0xf8] sm:$0xff]
    %v464 = vld [vmem:[#allocation11 + $0x100] sm:$0xff]
    %v465 = vld [vmem:[#allocation11 + $0x108] sm:$0xff]
    %v466 = vld [vmem:[#allocation11 + $0x110] sm:$0xff]
    %v467 = vld [vmem:[#allocation11 + $0x118] sm:$0xff]
    %v468 = vld [vmem:[#allocation11 + $0x120] sm:$0xff]
    %v469 = vld [vmem:[#allocation11 + $0x128] sm:$0xff]
    %v470 = vld [vmem:[#allocation11 + $0x130] sm:$0xff]
    %v471 = vld [vmem:[#allocation11 + $0x138] sm:$0xff]
    %v472 = vld [vmem:[#allocation11 + $0x140] sm:$0xff]
    %v473 = vld [vmem:[#allocation11 + $0x148] sm:$0xff]
    %v474 = vld [vmem:[#allocation11 + $0x150] sm:$0xff]
    %v475 = vld [vmem:[#allocation11 + $0x158] sm:$0xff]
    %v476 = vld [vmem:[#allocation11 + $0x160] sm:$0xff]
    %v477 = vld [vmem:[#allocation11 + $0x168] sm:$0xff]
    %v478 = vld [vmem:[#allocation11 + $0x170] sm:$0xff]
    %v479 = vld [vmem:[#allocation11 + $0x178] sm:$0xff]
    %v480 = vld [vmem:[#allocation11 + $0x180] sm:$0xff]
    %v481 = vld [vmem:[#allocation11 + $0x188] sm:$0xff]
    %v482 = vld [vmem:[#allocation11 + $0x190] sm:$0xff]
    %v483 = vld [vmem:[#allocation11 + $0x198] sm:$0xff]
    %v484 = vld [vmem:[#allocation11 + $0x1a0] sm:$0xff]
    %v485 = vld [vmem:[#allocation11 + $0x1a8] sm:$0xff]
    %v486 = vld [vmem:[#allocation11 + $0x1b0] sm:$0xff]
    %v487 = vld [vmem:[#allocation11 + $0x1b8] sm:$0xff]
    %v488 = vld [vmem:[#allocation11 + $0x1c0] sm:$0xff]
    %v489 = vld [vmem:[#allocation11 + $0x1c8] sm:$0xff]
    %v490 = vld [vmem:[#allocation11 + $0x1d0] sm:$0xff]
    %v491 = vld [vmem:[#allocation11 + $0x1d8] sm:$0xff]
    %v492 = vld [vmem:[#allocation11 + $0x1e0] sm:$0xff]
    %v493 = vld [vmem:[#allocation11 + $0x1e8] sm:$0xff]
    %v494 = vld [vmem:[#allocation11 + $0x1f0] sm:$0xff]
    %v495 = vld [vmem:[#allocation11 + $0x1f8] sm:$0xff]
    %v496 = vld [vmem:[#allocation11 + $0x200] sm:$0xff]
    %v497 = vld [vmem:[#allocation11 + $0x208] sm:$0xff]
    %v498 = vld [vmem:[#allocation11 + $0x210] sm:$0xff]
    %v499 = vld [vmem:[#allocation11 + $0x218] sm:$0xff]
    %v500 = vld [vmem:[#allocation11 + $0x220] sm:$0xff]
    %v501 = vld [vmem:[#allocation11 + $0x228] sm:$0xff]
    %v502 = vld [vmem:[#allocation11 + $0x230] sm:$0xff]
    %v503 = vld [vmem:[#allocation11 + $0x238] sm:$0xff]
    %v504 = vld [vmem:[#allocation11 + $0x240] sm:$0xff]
    %v505 = vld [vmem:[#allocation11 + $0x248] sm:$0xff]
    %v506 = vld [vmem:[#allocation11 + $0x250] sm:$0xff]
    %v507 = vld [vmem:[#allocation11 + $0x258] sm:$0xff]
    %v508 = vld [vmem:[#allocation11 + $0x260] sm:$0xff]
    %v509 = vld [vmem:[#allocation11 + $0x268] sm:$0xff]
    %v510 = vld [vmem:[#allocation11 + $0x270] sm:$0xff]
    %v511 = vld [vmem:[#allocation11 + $0x278] sm:$0xff]
    %v512 = vld [vmem:[#allocation11 + $0x280] sm:$0xff]
    %v513 = vld [vmem:[#allocation11 + $0x288] sm:$0xff]
    %v514 = vld [vmem:[#allocation11 + $0x290] sm:$0xff]
    %v515 = vld [vmem:[#allocation11 + $0x298] sm:$0xff]
    %v516 = vld [vmem:[#allocation11 + $0x2a0] sm:$0xff]
    %v517 = vld [vmem:[#allocation11 + $0x2a8] sm:$0xff]
    %v518 = vld [vmem:[#allocation11 + $0x2b0] sm:$0xff]
    %v519 = vld [vmem:[#allocation11 + $0x2b8] sm:$0xff]
    %v520 = vld [vmem:[#allocation11 + $0x2c0] sm:$0xff]
    %v521 = vld [vmem:[#allocation11 + $0x2c8] sm:$0xff]
    %v522 = vld [vmem:[#allocation11 + $0x2d0] sm:$0xff]
    %v523 = vld [vmem:[#allocation11 + $0x2d8] sm:$0xff]
    %v524 = vld [vmem:[#allocation11 + $0x2e0] sm:$0xff]
    %v525 = vld [vmem:[#allocation11 + $0x2e8] sm:$0xff]
    %v526 = vld [vmem:[#allocation11 + $0x2f0] sm:$0xff]
    %v527 = vld [vmem:[#allocation11 + $0x2f8] sm:$0xff]
    %v528 = vld [vmem:[#allocation11 + $0x300] sm:$0xff]
    %v529 = vld [vmem:[#allocation11 + $0x308] sm:$0xff]
    %v530 = vld [vmem:[#allocation11 + $0x310] sm:$0xff]
    %v531 = vld [vmem:[#allocation11 + $0x318] sm:$0xff]
    %v532 = vld [vmem:[#allocation11 + $0x320] sm:$0xff]
    %v533 = vld [vmem:[#allocation11 + $0x328] sm:$0xff]
    %v534 = vld [vmem:[#allocation11 + $0x330] sm:$0xff]
    %v535 = vld [vmem:[#allocation11 + $0x338] sm:$0xff]
    %v536 = vld [vmem:[#allocation11 + $0x340] sm:$0xff]
    %v537 = vld [vmem:[#allocation11 + $0x348] sm:$0xff]
    %v538 = vld [vmem:[#allocation11 + $0x350] sm:$0xff]
    %v539 = vld [vmem:[#allocation11 + $0x358] sm:$0xff]
    %v540 = vld [vmem:[#allocation11 + $0x360] sm:$0xff]
    %v541 = vld [vmem:[#allocation11 + $0x368] sm:$0xff]
    %v542 = vld [vmem:[#allocation11 + $0x370] sm:$0xff]
    %v543 = vld [vmem:[#allocation11 + $0x378] sm:$0xff]
    %v544 = vld [vmem:[#allocation11 + $0x380] sm:$0xff]
    %v545 = vld [vmem:[#allocation11 + $0x388] sm:$0xff]
    %v546 = vld [vmem:[#allocation11 + $0x390] sm:$0xff]
    %v547 = vld [vmem:[#allocation11 + $0x398] sm:$0xff]
    %v548 = vld [vmem:[#allocation11 + $0x3a0] sm:$0xff]
    %v549 = vld [vmem:[#allocation11 + $0x3a8] sm:$0xff]
    %v550 = vld [vmem:[#allocation11 + $0x3b0] sm:$0xff]
    %v551 = vld [vmem:[#allocation11 + $0x3b8] sm:$0xff]
    %v552 = vld [vmem:[#allocation11 + $0x3c0] sm:$0xff]
    %v553 = vld [vmem:[#allocation11 + $0x3c8] sm:$0xff]
    %v554 = vld [vmem:[#allocation11 + $0x3d0] sm:$0xff]
    %v555 = vld [vmem:[#allocation11 + $0x3d8] sm:$0xff]
    %v556 = vld [vmem:[#allocation11 + $0x3e0] sm:$0xff]
    %v557 = vld [vmem:[#allocation11 + $0x3e8] sm:$0xff]
    %v558 = vld [vmem:[#allocation11 + $0x3f0] sm:$0xff]
    %v559 = vld [vmem:[#allocation11 + $0x3f8] sm:$0xff]
    %v560 = vld [vmem:[#allocation11 + $0x400] sm:$0xff]
    %v561 = vld [vmem:[#allocation11 + $0x408] sm:$0xff]
    %v562 = vld [vmem:[#allocation11 + $0x410] sm:$0xff]
    %v563 = vld [vmem:[#allocation11 + $0x418] sm:$0xff]
    %v564 = vld [vmem:[#allocation11 + $0x420] sm:$0xff]
    %v565 = vld [vmem:[#allocation11 + $0x428] sm:$0xff]
    %v566 = vld [vmem:[#allocation11 + $0x430] sm:$0xff]
    %v567 = vld [vmem:[#allocation11 + $0x438] sm:$0xff]
    %v568 = vld [vmem:[#allocation11 + $0x440] sm:$0xff]
    %v569 = vld [vmem:[#allocation11 + $0x448] sm:$0xff]
    %v570 = vld [vmem:[#allocation11 + $0x450] sm:$0xff]
    %v571 = vld [vmem:[#allocation11 + $0x458] sm:$0xff]
    %v572 = vld [vmem:[#allocation11 + $0x460] sm:$0xff]
    %v573 = vld [vmem:[#allocation11 + $0x468] sm:$0xff]
    %v574 = vld [vmem:[#allocation11 + $0x470] sm:$0xff]
    %v575 = vld [vmem:[#allocation11 + $0x478] sm:$0xff]
    %v576 = vld [vmem:[#allocation11 + $0x480] sm:$0xff]
    %v577 = vld [vmem:[#allocation11 + $0x488] sm:$0xff]
    %v578 = vld [vmem:[#allocation11 + $0x490] sm:$0xff]
    %v579 = vld [vmem:[#allocation11 + $0x498] sm:$0xff]
    %v580 = vld [vmem:[#allocation11 + $0x4a0] sm:$0xff]
    %v581 = vld [vmem:[#allocation11 + $0x4a8] sm:$0xff]
    %v582 = vld [vmem:[#allocation11 + $0x4b0] sm:$0xff]
    %v583 = vld [vmem:[#allocation11 + $0x4b8] sm:$0xff]
    %v584 = vld [vmem:[#allocation11 + $0x4c0] sm:$0xff]
    %v585 = vld [vmem:[#allocation11 + $0x4c8] sm:$0xff]
    %v586 = vld [vmem:[#allocation11 + $0x4d0] sm:$0xff]
    %v587 = vld [vmem:[#allocation11 + $0x4d8] sm:$0xff]
    %v588 = vld [vmem:[#allocation11 + $0x4e0] sm:$0xff]
    %v589 = vld [vmem:[#allocation11 + $0x4e8] sm:$0xff]
    %v590 = vld [vmem:[#allocation11 + $0x4f0] sm:$0xff]
    %v591 = vld [vmem:[#allocation11 + $0x4f8] sm:$0xff]
    %v592 = vld [vmem:[#allocation11 + $0x500] sm:$0xff]
    %v593 = vld [vmem:[#allocation11 + $0x508] sm:$0xff]
    %v594 = vld [vmem:[#allocation11 + $0x510] sm:$0xff]
    %v595 = vld [vmem:[#allocation11 + $0x518] sm:$0xff]
    %v596 = vld [vmem:[#allocation11 + $0x520] sm:$0xff]
    %v597 = vld [vmem:[#allocation11 + $0x528] sm:$0xff]
    %v598 = vld [vmem:[#allocation11 + $0x530] sm:$0xff]
    %v599 = vld [vmem:[#allocation11 + $0x538] sm:$0xff]
    %v600 = vld [vmem:[#allocation11 + $0x540] sm:$0xff]
    %v601 = vld [vmem:[#allocation11 + $0x548] sm:$0xff]
    %v602 = vld [vmem:[#allocation11 + $0x550] sm:$0xff]
    %v603 = vld [vmem:[#allocation11 + $0x558] sm:$0xff]
    %v604 = vld [vmem:[#allocation11 + $0x560] sm:$0xff]
    %v605 = vld [vmem:[#allocation11 + $0x568] sm:$0xff]
    %v606 = vld [vmem:[#allocation11 + $0x570] sm:$0xff]
    %v607 = vld [vmem:[#allocation11 + $0x578] sm:$0xff]
    %v608 = vld [vmem:[#allocation11 + $0x580] sm:$0xff]
    %v609 = vld [vmem:[#allocation11 + $0x588] sm:$0xff]
    %v610 = vld [vmem:[#allocation11 + $0x590] sm:$0xff]
    %v611 = vld [vmem:[#allocation11 + $0x598] sm:$0xff]
    %v612 = vld [vmem:[#allocation11 + $0x5a0] sm:$0xff]
    %v613 = vld [vmem:[#allocation11 + $0x5a8] sm:$0xff]
    %v614 = vld [vmem:[#allocation11 + $0x5b0] sm:$0xff]
    %v615 = vld [vmem:[#allocation11 + $0x5b8] sm:$0xff]
    %v616 = vld [vmem:[#allocation11 + $0x5c0] sm:$0xff]
    %v617 = vld [vmem:[#allocation11 + $0x5c8] sm:$0xff]
    %v618 = vld [vmem:[#allocation11 + $0x5d0] sm:$0xff]
    %v619 = vld [vmem:[#allocation11 + $0x5d8] sm:$0xff]
    %v620 = vld [vmem:[#allocation11 + $0x5e0] sm:$0xff]
    %v621 = vld [vmem:[#allocation11 + $0x5e8] sm:$0xff]
    %v622 = vld [vmem:[#allocation11 + $0x5f0] sm:$0xff]
    %v623 = vld [vmem:[#allocation11 + $0x5f8] sm:$0xff]
    %v624 = vld [vmem:[%s6] sm:$0xf]
    %v626 = vlaneseq
    %v627 = vshrl.u32 %v626, 7
    %v628 = vsub.s32 0, %v627
    %v629 = vrot.slane %v624, %v628
    %v630 = vlaneseq
    %v631 = vshrl.u32 %v630, 7
    %v632 = vsub.s32 1, %v631
    %v633 = vrot.slane %v624, %v632
    %v634 = vlaneseq
    %v635 = vshrl.u32 %v634, 7
    %v636 = vsub.s32 2, %v635
    %v637 = vrot.slane %v624, %v636
    %v638 = vlaneseq
    %v639 = vshrl.u32 %v638, 7
    %v640 = vsub.s32 3, %v639
    %v641 = vrot.slane %v624, %v640
    %646 = vmatprep.subr.mxu0 %v493
    %647 = vmatpush1.msra.mxu0 %v492
    %648 = vmatprep.subr.mxu0 %v489
    %649 = vmatpush1.msra.mxu0 %v488
    %650 = vmatprep.subr.mxu0 %v485
    %651 = vmatpush1.msra.mxu0 %v484
    %652 = vmatprep.subr.mxu0 %v481
    %653 = vmatpush1.msra.mxu0 %v480
    %654 = vmatprep.subr.mxu0 %v477
    %655 = vmatpush1.msra.mxu0 %v476
    %656 = vmatprep.subr.mxu0 %v473
    %657 = vmatpush1.msra.mxu0 %v472
    %658 = vmatprep.subr.mxu0 %v469
    %659 = vmatpush1.msra.mxu0 %v468
    %660 = vmatprep.subr.mxu0 %v465
    %661 = vmatpush1.msra.mxu0 %v464
    %662 = vmatprep.subr.mxu0 %v461
    %663 = vmatpush1.msra.mxu0 %v460
    %664 = vmatprep.subr.mxu0 %v457
    %665 = vmatpush1.msra.mxu0 %v456
    %666 = vmatprep.subr.mxu0 %v453
    %667 = vmatpush1.msra.mxu0 %v452
    %668 = vmatprep.subr.mxu0 %v449
    %669 = vmatpush1.msra.mxu0 %v448
    %670 = vmatprep.subr.mxu0 %v445
    %671 = vmatpush1.msra.mxu0 %v444
    %672 = vmatprep.subr.mxu0 %v441
    %673 = vmatpush1.msra.mxu0 %v440
    %674 = vmatprep.subr.mxu0 %v437
    %675 = vmatpush1.msra.mxu0 %v436
    %676 = vmatprep.subr.mxu0 %v433
    %677 = vmatpush1.msra.mxu0 %v432
    %678 = vmatprep.subr.mxu0 %v557
    %679 = vmatpush2.msra.mxu0 %v556
    %680 = vmatprep.subr.mxu0 %v553
    %681 = vmatpush2.msra.mxu0 %v552
    %682 = vmatprep.subr.mxu0 %v549
    %683 = vmatpush2.msra.mxu0 %v548
    %684 = vmatprep.subr.mxu0 %v545
    %685 = vmatpush2.msra.mxu0 %v544
    %686 = vmatprep.subr.mxu0 %v541
    %687 = vmatpush2.msra.mxu0 %v540
    %688 = vmatprep.subr.mxu0 %v537
    %689 = vmatpush2.msra.mxu0 %v536
    %690 = vmatprep.subr.mxu0 %v533
    %691 = vmatpush2.msra.mxu0 %v532
    %692 = vmatprep.subr.mxu0 %v529
    %693 = vmatpush2.msra.mxu0 %v528
    %694 = vmatprep.subr.mxu0 %v525
    %695 = vmatpush2.msra.mxu0 %v524
    %696 = vmatprep.subr.mxu0 %v521
    %697 = vmatpush2.msra.mxu0 %v520
    %698 = vmatprep.subr.mxu0 %v517
    %699 = vmatpush2.msra.mxu0 %v516
    %700 = vmatprep.subr.mxu0 %v513
    %701 = vmatpush2.msra.mxu0 %v512
    %702 = vmatprep.subr.mxu0 %v509
    %703 = vmatpush2.msra.mxu0 %v508
    %704 = vmatprep.subr.mxu0 %v505
    %705 = vmatpush2.msra.mxu0 %v504
    %706 = vmatprep.subr.mxu0 %v501
    %707 = vmatpush2.msra.mxu0 %v500
    %708 = vmatprep.subr.mxu0 %v497
    %709 = vmatpush2.msra.mxu0 %v496
    %710 = vmatprep.mubr.f32.mxu0 %v430
    %711 = vmatmul.mubr.f32.gmra.mxu0 %v429
    %v712 = vpop.f32.mrf.mxu0
    %v713 = vadd.f32 %v629, %v712
    %v714 = vpop.f32.mrf.mxu0
    %v715 = vadd.f32 %v633, %v714
    %716 = vdwg.mxu0
    %717 = vmatprep.subr.mxu0 %v621
    %718 = vmatpush1.msra.mxu0 %v620
    %719 = vmatprep.subr.mxu0 %v617
    %720 = vmatpush1.msra.mxu0 %v616
    %721 = vmatprep.subr.mxu0 %v613
    %722 = vmatpush1.msra.mxu0 %v612
    %723 = vmatprep.subr.mxu0 %v609
    %724 = vmatpush1.msra.mxu0 %v608
    %725 = vmatprep.subr.mxu0 %v605
    %726 = vmatpush1.msra.mxu0 %v604
    %727 = vmatprep.subr.mxu0 %v601
    %728 = vmatpush1.msra.mxu0 %v600
    %729 = vmatprep.subr.mxu0 %v597
    %730 = vmatpush1.msra.mxu0 %v596
    %731 = vmatprep.subr.mxu0 %v593
    %732 = vmatpush1.msra.mxu0 %v592
    %733 = vmatprep.subr.mxu0 %v589
    %734 = vmatpush1.msra.mxu0 %v588
    %735 = vmatprep.subr.mxu0 %v585
    %736 = vmatpush1.msra.mxu0 %v584
    %737 = vmatprep.subr.mxu0 %v581
    %738 = vmatpush1.msra.mxu0 %v580
    %739 = vmatprep.subr.mxu0 %v577
    %740 = vmatpush1.msra.mxu0 %v576
    %741 = vmatprep.subr.mxu0 %v573
    %742 = vmatpush1.msra.mxu0 %v572
    %743 = vmatprep.subr.mxu0 %v569
    %744 = vmatpush1.msra.mxu0 %v568
    %745 = vmatprep.subr.mxu0 %v565
    %746 = vmatpush1.msra.mxu0 %v564
    %747 = vmatprep.subr.mxu0 %v561
    %748 = vmatpush1.msra.mxu0 %v560
    %749 = vmatprep.subr.mxu0 0.0
    %750 = vmatpush2.msra.mxu0 0.0
    %751 = vmatprep.subr.mxu0 0.0
    %752 = vmatpush2.msra.mxu0 0.0
    %753 = vmatprep.subr.mxu0 0.0
    %754 = vmatpush2.msra.mxu0 0.0
    %755 = vmatprep.subr.mxu0 0.0
    %756 = vmatpush2.msra.mxu0 0.0
    %757 = vmatprep.subr.mxu0 0.0
    %758 = vmatpush2.msra.mxu0 0.0
    %759 = vmatprep.subr.mxu0 0.0
    %760 = vmatpush2.msra.mxu0 0.0
    %761 = vmatprep.subr.mxu0 0.0
    %762 = vmatpush2.msra.mxu0 0.0
    %763 = vmatprep.subr.mxu0 0.0
    %764 = vmatpush2.msra.mxu0 0.0
    %765 = vmatprep.subr.mxu0 0.0
    %766 = vmatpush2.msra.mxu0 0.0
    %767 = vmatprep.subr.mxu0 0.0
    %768 = vmatpush2.msra.mxu0 0.0
    %769 = vmatprep.subr.mxu0 0.0
    %770 = vmatpush2.msra.mxu0 0.0
    %771 = vmatprep.subr.mxu0 0.0
    %772 = vmatpush2.msra.mxu0 0.0
    %773 = vmatprep.subr.mxu0 0.0
    %774 = vmatpush2.msra.mxu0 0.0
    %775 = vmatprep.subr.mxu0 0.0
    %776 = vmatpush2.msra.mxu0 0.0
    %777 = vmatprep.subr.mxu0 0.0
    %778 = vmatpush2.msra.mxu0 0.0
    %779 = vmatprep.subr.mxu0 0.0
    %780 = vmatpush2.msra.mxu0 0.0
    %781 = vmatprep.mubr.f32.mxu0 0.0
    %782 = vmatmul.mubr.f32.gmra.mxu0 %v431
    %v783 = vpop.f32.mrf.mxu0
    %v784 = vadd.f32 %v713, %v783
    %v785 = vpop.f32.mrf.mxu0
    %v786 = vadd.f32 %v715, %v785
    %787 = vdwg.mxu0
    %788 = vmatprep.subr.mxu0 %v495
    %789 = vmatpush1.msra.mxu0 %v494
    %790 = vmatprep.subr.mxu0 %v491
    %791 = vmatpush1.msra.mxu0 %v490
    %792 = vmatprep.subr.mxu0 %v487
    %793 = vmatpush1.msra.mxu0 %v486
    %794 = vmatprep.subr.mxu0 %v483
    %795 = vmatpush1.msra.mxu0 %v482
    %796 = vmatprep.subr.mxu0 %v479
    %797 = vmatpush1.msra.mxu0 %v478
    %798 = vmatprep.subr.mxu0 %v475
    %799 = vmatpush1.msra.mxu0 %v474
    %800 = vmatprep.subr.mxu0 %v471
    %801 = vmatpush1.msra.mxu0 %v470
    %802 = vmatprep.subr.mxu0 %v467
    %803 = vmatpush1.msra.mxu0 %v466
    %804 = vmatprep.subr.mxu0 %v463
    %805 = vmatpush1.msra.mxu0 %v462
    %806 = vmatprep.subr.mxu0 %v459
    %807 = vmatpush1.msra.mxu0 %v458
    %808 = vmatprep.subr.mxu0 %v455
    %809 = vmatpush1.msra.mxu0 %v454
    %810 = vmatprep.subr.mxu0 %v451
    %811 = vmatpush1.msra.mxu0 %v450
    %812 = vmatprep.subr.mxu0 %v447
    %813 = vmatpush1.msra.mxu0 %v446
    %814 = vmatprep.subr.mxu0 %v443
    %815 = vmatpush1.msra.mxu0 %v442
    %816 = vmatprep.subr.mxu0 %v439
    %817 = vmatpush1.msra.mxu0 %v438
    %818 = vmatprep.subr.mxu0 %v435
    %819 = vmatpush1.msra.mxu0 %v434
    %820 = vmatprep.subr.mxu0 %v559
    %821 = vmatpush2.msra.mxu0 %v558
    %822 = vmatprep.subr.mxu0 %v555
    %823 = vmatpush2.msra.mxu0 %v554
    %824 = vmatprep.subr.mxu0 %v551
    %825 = vmatpush2.msra.mxu0 %v550
    %826 = vmatprep.subr.mxu0 %v547
    %827 = vmatpush2.msra.mxu0 %v546
    %828 = vmatprep.subr.mxu0 %v543
    %829 = vmatpush2.msra.mxu0 %v542
    %830 = vmatprep.subr.mxu0 %v539
    %831 = vmatpush2.msra.mxu0 %v538
    %832 = vmatprep.subr.mxu0 %v535
    %833 = vmatpush2.msra.mxu0 %v534
    %834 = vmatprep.subr.mxu0 %v531
    %835 = vmatpush2.msra.mxu0 %v530
    %836 = vmatprep.subr.mxu0 %v527
    %837 = vmatpush2.msra.mxu0 %v526
    %838 = vmatprep.subr.mxu0 %v523
    %839 = vmatpush2.msra.mxu0 %v522
    %840 = vmatprep.subr.mxu0 %v519
    %841 = vmatpush2.msra.mxu0 %v518
    %842 = vmatprep.subr.mxu0 %v515
    %843 = vmatpush2.msra.mxu0 %v514
    %844 = vmatprep.subr.mxu0 %v511
    %845 = vmatpush2.msra.mxu0 %v510
    %846 = vmatprep.subr.mxu0 %v507
    %847 = vmatpush2.msra.mxu0 %v506
    %848 = vmatprep.subr.mxu0 %v503
    %849 = vmatpush2.msra.mxu0 %v502
    %850 = vmatprep.subr.mxu0 %v499
    %851 = vmatpush2.msra.mxu0 %v498
    %852 = vmatprep.mubr.f32.mxu0 %v430
    %853 = vmatmul.mubr.f32.gmra.mxu0 %v429
    %v854 = vpop.f32.mrf.mxu0
    %v855 = vadd.f32 %v637, %v854
    %v856 = vpop.f32.mrf.mxu0
    %v857 = vadd.f32 %v641, %v856
    %858 = vdwg.mxu0
    %859 = vmatprep.subr.mxu0 %v623
    %860 = vmatpush1.msra.mxu0 %v622
    %861 = vmatprep.subr.mxu0 %v619
    %862 = vmatpush1.msra.mxu0 %v618
    %863 = vmatprep.subr.mxu0 %v615
    %864 = vmatpush1.msra.mxu0 %v614
    %865 = vmatprep.subr.mxu0 %v611
    %866 = vmatpush1.msra.mxu0 %v610
    %867 = vmatprep.subr.mxu0 %v607
    %868 = vmatpush1.msra.mxu0 %v606
    %869 = vmatprep.subr.mxu0 %v603
    %870 = vmatpush1.msra.mxu0 %v602
    %871 = vmatprep.subr.mxu0 %v599
    %872 = vmatpush1.msra.mxu0 %v598
    %873 = vmatprep.subr.mxu0 %v595
    %874 = vmatpush1.msra.mxu0 %v594
    %875 = vmatprep.subr.mxu0 %v591
    %876 = vmatpush1.msra.mxu0 %v590
    %877 = vmatprep.subr.mxu0 %v587
    %878 = vmatpush1.msra.mxu0 %v586
    %879 = vmatprep.subr.mxu0 %v583
    %880 = vmatpush1.msra.mxu0 %v582
    %881 = vmatprep.subr.mxu0 %v579
    %882 = vmatpush1.msra.mxu0 %v578
    %883 = vmatprep.subr.mxu0 %v575
    %884 = vmatpush1.msra.mxu0 %v574
    %885 = vmatprep.subr.mxu0 %v571
    %886 = vmatpush1.msra.mxu0 %v570
    %887 = vmatprep.subr.mxu0 %v567
    %888 = vmatpush1.msra.mxu0 %v566
    %889 = vmatprep.subr.mxu0 %v563
    %890 = vmatpush1.msra.mxu0 %v562
    %891 = vmatprep.subr.mxu0 0.0
    %892 = vmatpush2.msra.mxu0 0.0
    %893 = vmatprep.subr.mxu0 0.0
    %894 = vmatpush2.msra.mxu0 0.0
    %895 = vmatprep.subr.mxu0 0.0
    %896 = vmatpush2.msra.mxu0 0.0
    %897 = vmatprep.subr.mxu0 0.0
    %898 = vmatpush2.msra.mxu0 0.0
    %899 = vmatprep.subr.mxu0 0.0
    %900 = vmatpush2.msra.mxu0 0.0
    %901 = vmatprep.subr.mxu0 0.0
    %902 = vmatpush2.msra.mxu0 0.0
    %903 = vmatprep.subr.mxu0 0.0
    %904 = vmatpush2.msra.mxu0 0.0
    %905 = vmatprep.subr.mxu0 0.0
    %906 = vmatpush2.msra.mxu0 0.0
    %907 = vmatprep.subr.mxu0 0.0
    %908 = vmatpush2.msra.mxu0 0.0
    %909 = vmatprep.subr.mxu0 0.0
    %910 = vmatpush2.msra.mxu0 0.0
    %911 = vmatprep.subr.mxu0 0.0
    %912 = vmatpush2.msra.mxu0 0.0
    %913 = vmatprep.subr.mxu0 0.0
    %914 = vmatpush2.msra.mxu0 0.0
    %915 = vmatprep.subr.mxu0 0.0
    %916 = vmatpush2.msra.mxu0 0.0
    %917 = vmatprep.subr.mxu0 0.0
    %918 = vmatpush2.msra.mxu0 0.0
    %919 = vmatprep.subr.mxu0 0.0
    %920 = vmatpush2.msra.mxu0 0.0
    %921 = vmatprep.subr.mxu0 0.0
    %922 = vmatpush2.msra.mxu0 0.0
    %923 = vmatprep.mubr.f32.mxu0 0.0
    %924 = vmatmul.mubr.f32.gmra.mxu0 %v431
    %v925 = vpop.f32.mrf.mxu0
    %v926 = vadd.f32 %v855, %v925
    %v927 = vpop.f32.mrf.mxu0
    %v928 = vadd.f32 %v857, %v927
    %929 = vdwg.mxu0
    %v930 = vmax.f32 %v784, 0.0
    %v931 = vmax.f32 %v786, 0.0
    %v932 = vmax.f32 %v926, 0.0
    %v933 = vmax.f32 %v928, 0.0
    %v934 = vld [vmem:[%s7] sm:$0xf]
    %v936 = vlaneseq
    %v937 = vshrl.u32 %v936, 7
    %v938 = vsub.s32 0, %v937
    %v939 = vrot.slane %v934, %v938
    %v940 = vlaneseq
    %v941 = vshrl.u32 %v940, 7
    %v942 = vsub.s32 1, %v941
    %v943 = vrot.slane %v934, %v942
    %v944 = vlaneseq
    %v945 = vshrl.u32 %v944, 7
    %v946 = vsub.s32 2, %v945
    %v947 = vrot.slane %v934, %v946
    %v948 = vlaneseq
    %v949 = vshrl.u32 %v948, 7
    %v950 = vsub.s32 3, %v949
    %v951 = vrot.slane %v934, %v950
    %v956 = vmul.f32 %v930, %v939
    %v957 = vmul.f32 %v931, %v943
    %v958 = vmul.f32 %v932, %v947
    %v959 = vmul.f32 %v933, %v951
    %v960 = vadd.f32 %v956, %v957
    %v961 = vadd.f32 %v960, %v958
    %v962 = vadd.f32 %v961, %v959
    %963 = vadd.xlane.f32.xlu0 %v962
    %v964 = vpop.xlane.xlu0 %963
    %v965 = vld [vmem:[#allocation2] sm:$0x1]
    %v967 = vlaneseq
    %v968 = vshrl.u32 %v967, 7
    %v969 = vsub.s32 0, %v968
    %v970 = vrot.slane %v965, %v969
    %v972 = vadd.f32 %v964, %v970
    %vm973 = vcmask 7168
    %974 = vst.msk [vmem:[%s9] sm:$0xff] %vm973, %v972
    // Predicated region
    $region62: #{tpu_custom_call.1} parent=1 // pred_check
      _
    $region63: #{tpu_custom_call.1} parent=1 // pred_check_branch
      %976 = sbr.rel (0) target = $region65
    $region64: #{tpu_custom_call.1} parent=1 // pred_region
      _
    $region65: #{tpu_custom_call.1} parent=1 // pred_fallthru
      _
    // Predicated region
    $region66: #{tpu_custom_call.1} parent=1 // pred_check
      _
    $region67: #{tpu_custom_call.1} parent=1 // pred_check_branch
      %978 = sbr.rel (0) target = $region69
    $region68: #{tpu_custom_call.1} parent=1 // pred_region
      _
    $region69: #{tpu_custom_call.1} parent=1 // pred_fallthru
      _
    %979 = vsyncpa [#allocation4], 1
    %980 = vsyncpa [#allocation6], 1
    %981 = vsyncpa [#allocation9], 1
    %982 = vsyncpa [#allocation12], 1

</llo_original>
